<compile_context>
chip_gen: v7x
topology: tpu7x:2x2x1
jax: 0.10.0
libtpu: 0.0.40
codegen_flags: <defaults>
</compile_context>

<pallas_src>
import jax
import jax.numpy as jnp
from jax.experimental import pallas as pl
from jax.experimental.pallas import tpu as pltpu

N_BINS = 15
_VMEM_LIMIT = 32 * 1024 * 1024          # safe scoped-VMEM request on v5e / v6e / v7x
_BLOCK_BYTE_BUDGET = 4 * 1024 * 1024    # per-step (in + out) block budget, pre double-buffer


def _round_up(x, m):
    return ((x + m - 1) // m) * m


def _pick_tile_n(n, c, cap=1024):
    """Largest multiple-of-8 row tile <= cap that keeps f32 blocks within the VMEM budget."""
    budget_rows = max(8, _BLOCK_BYTE_BUDGET // max(1, 8 * c))   # in + out f32 blocks
    tile = min(cap, budget_rows, _round_up(n, 8))
    return max(8, (tile // 8) * 8)


# ---------------------------------------------------------------------------
# Training kernel: scale + ECE (grid reduction over batch tiles)
# ---------------------------------------------------------------------------
def _make_train_kernel(n_actual, tile_n):
    def kernel(x_ref, tinv_ref, labels_ref, scaled_ref, ece_ref, bin_acc_ref):
        i = pl.program_id(0)

        @pl.when(i == 0)
        def _():
            bin_acc_ref[...] = jnp.zeros_like(bin_acc_ref)

        x = x_ref[...]                                   # [T, C] f32
        scaled = x * tinv_ref[...]                       # broadcast multiply by 1/temperature
        scaled_ref[...] = scaled

        t, c = scaled.shape

        # max softmax prob without materializing p:  exp(0) / sum(exp(scaled - max)) = 1 / s
        m = jnp.max(scaled, axis=1, keepdims=True)                       # [T, 1]
        e = jnp.exp(scaled - m)                                           # [T, C]
        s = jnp.sum(e, axis=1, keepdims=True)                             # [T, 1]
        # approx=False keeps the bin assignment bit-stable near bin boundaries; the op is a
        # single-lane [T, 1] column so the cost vs. the EUP approximation is negligible.
        conf = pl.reciprocal(s, approx=False)                             # [T, 1]

        # argmax on raw scaled logits (softmax is monotone); min-index tie-break = torch.max.
        col = jax.lax.broadcasted_iota(jnp.int32, (t, c), 1)
        pred = jnp.min(jnp.where(scaled == m, col, c), axis=1, keepdims=True)   # [T, 1] int32
        acc = (pred == labels_ref[...]).astype(jnp.float32)                     # [T, 1]

        # mask batch-padding rows (N was rounded up to a multiple of TILE_N)
        row = i * tile_n + jax.lax.broadcasted_iota(jnp.int32, (t, 1), 0)
        valid = (row < n_actual).astype(jnp.float32)
        diff = (conf - acc) * valid                                             # [T, 1]

        # vectorized 15-bin assignment: bin b covers (b/15, (b+1)/15]
        bin_idx = jnp.clip(jnp.ceil(conf * N_BINS).astype(jnp.int32) - 1,
                           0, N_BINS - 1)                                       # [T, 1]
        bins = jax.lax.broadcasted_iota(jnp.int32, (t, N_BINS), 1)
        onehot = (bins == bin_idx).astype(jnp.float32)                          # [T, 15]
        bin_acc_ref[...] += jnp.sum(onehot * diff, axis=0, keepdims=True)       # [1, 15]

        # ECE = sum_b |sum_{i in bin b} (conf_i - acc_i)| / N  (empty bins contribute 0).
        # Running value is written every step; the last step's value is the final ECE.
        ece_ref[...] = jnp.sum(jnp.abs(bin_acc_ref[...]), keepdims=True) / n_actual

    return kernel


# ---------------------------------------------------------------------------
# Eval kernel: pure element-wise scale
# ---------------------------------------------------------------------------
def _scale_kernel(x_ref, tinv_ref, o_ref):
    o_ref[...] = x_ref[...] * tinv_ref[...]


def _scale_only(logits, t_inv):
    n, c = logits.shape
    lane_dense = (c <= 128) and (128 % c == 0) and ((n * c) % 128 == 0)

    if lane_dense:
        # free row-major reshape to a lane-dense [R, 128] view; temperature pattern tiles lanes
        r = (n * c) // 128
        x = logits.reshape(r, 128)
        t_row = jnp.tile(t_inv, (1, 128 // c))                       # [1, 128]
        tile_r = max(8, (min(2048, _round_up(r, 8)) // 8) * 8)
        r_pad = _round_up(r, tile_r)
        if r_pad != r:
            x = jnp.pad(x, ((0, r_pad - r), (0, 0)))
        out = pl.pallas_call(
            _scale_kernel,
            out_shape=jax.ShapeDtypeStruct((r_pad, 128), jnp.float32),
            grid=(r_pad // tile_r,),
            in_specs=[pl.BlockSpec((tile_r, 128), lambda i: (i, 0)),
                      pl.BlockSpec((1, 128), lambda i: (0, 0))],
            out_specs=pl.BlockSpec((tile_r, 128), lambda i: (i, 0)),
            compiler_params=pltpu.CompilerParams(
                dimension_semantics=("parallel",),
                vmem_limit_bytes=_VMEM_LIMIT),
        )(x, t_row)
        if r_pad != r:
            out = out[:r]
        return out.reshape(n, c)

    # fallback: [TILE_N, C] blocks when C is not a friendly divisor of 128
    tile_n = _pick_tile_n(n, c)
    n_pad = _round_up(n, tile_n)
    x = jnp.pad(logits, ((0, n_pad - n), (0, 0))) if n_pad != n else logits
    out = pl.pallas_call(
        _scale_kernel,
        out_shape=jax.ShapeDtypeStruct((n_pad, c), jnp.float32),
        grid=(n_pad // tile_n,),
        in_specs=[pl.BlockSpec((tile_n, c), lambda i: (i, 0)),
                  pl.BlockSpec((1, c), lambda i: (0, 0))],
        out_specs=pl.BlockSpec((tile_n, c), lambda i: (i, 0)),
        compiler_params=pltpu.CompilerParams(
            dimension_semantics=("parallel",),
            vmem_limit_bytes=_VMEM_LIMIT),
    )(x, t_inv)
    return out[:n] if n_pad != n else out


# ---------------------------------------------------------------------------
# Module forward
# ---------------------------------------------------------------------------
def temperature_scale_forward(Simple_vector, temperature, label_list=None, training=True):
    """Temperature_scale.forward.

    Simple_vector: [N, C] logits; temperature: [C] per-class temperature;
    label_list: [N] int labels (training mode only).
    """
    logits = Simple_vector.astype(jnp.float32)
    n, c = logits.shape
    t_inv = (1.0 / temperature.astype(jnp.float32)).reshape(1, c)

    if not training:
        return _scale_only(logits, t_inv)

    labels_2d = label_list.reshape(n, 1).astype(jnp.int32)

    tile_n = _pick_tile_n(n, c)
    n_pad = _round_up(n, tile_n)
    if n_pad != n:
        logits_p = jnp.pad(logits, ((0, n_pad - n), (0, 0)))
        labels_p = jnp.pad(labels_2d, ((0, n_pad - n), (0, 0)), constant_values=-1)
    else:
        logits_p, labels_p = logits, labels_2d

    kernel = _make_train_kernel(n, tile_n)
    scaled_p, ece = pl.pallas_call(
        kernel,
        out_shape=(jax.ShapeDtypeStruct((n_pad, c), jnp.float32),
                   jax.ShapeDtypeStruct((1, 1), jnp.float32)),
        grid=(n_pad // tile_n,),
        in_specs=[pl.BlockSpec((tile_n, c), lambda i: (i, 0)),
                  pl.BlockSpec((1, c), lambda i: (0, 0)),
                  pl.BlockSpec((tile_n, 1), lambda i: (i, 0))],
        out_specs=(pl.BlockSpec((tile_n, c), lambda i: (i, 0)),
                   pl.BlockSpec((1, 1), lambda i: (0, 0))),
        scratch_shapes=[pltpu.VMEM((1, N_BINS), jnp.float32)],
        compiler_params=pltpu.CompilerParams(
            dimension_semantics=("arbitrary",),    # ECE is a reduction over the batch tiles
            vmem_limit_bytes=_VMEM_LIMIT),
    )(logits_p, t_inv, labels_p)

    scaled = scaled_p[:n] if n_pad != n else scaled_p
    loss = ece[0, 0]
    softmaxed = None
    return scaled, loss, softmaxed


# ---------------------------------------------------------------------------
# Pure-JAX reference (torch ECE_LOSS semantics) used only for sanity checking
# ---------------------------------------------------------------------------
def _reference_ece(logits_scaled, labels, n_bins=N_BINS):
    p = jax.nn.softmax(logits_scaled, axis=1)
    conf = jnp.max(p, axis=1)
    pred = jnp.argmax(p, axis=1)
    acc = (pred == labels).astype(jnp.float32)
    bounds = jnp.linspace(0.0, 1.0, n_bins + 1)
    ece = 0.0
    for b in range(n_bins):
        in_bin = (conf > bounds[b]) & (conf <= bounds[b + 1])
        cnt = jnp.maximum(jnp.sum(in_bin), 1)
        prop = jnp.mean(in_bin.astype(jnp.float32))
        acc_in = jnp.sum(jnp.where(in_bin, acc, 0.0)) / cnt
        conf_in = jnp.sum(jnp.where(in_bin, conf, 0.0)) / cnt
        ece = ece + jnp.where(prop > 0, jnp.abs(conf_in - acc_in) * prop, 0.0)
    return ece


if __name__ == "__main__":
    import numpy as np

    key = jax.random.PRNGKey(0)
    N, C = 64, 8                                            # batch, num classes

    k1, k2 = jax.random.split(key)
    logits = jax.random.normal(k1, (N, C), dtype=jnp.float32) * 3.0
    labels = jax.random.randint(k2, (N,), 0, C, dtype=jnp.int32)
    temperature = jnp.ones((C,), dtype=jnp.float32) * 1.5   # nn.Parameter init: ones * 1.5

    # training path: (scaled, loss, softmaxed=None)
    scaled, loss, softmaxed = temperature_scale_forward(
        logits, temperature, labels, training=True)
    jax.block_until_ready(scaled)
    jax.block_until_ready(loss)

    # eval path: scaled logits only (scale-only lane-dense kernel)
    scaled_eval = temperature_scale_forward(logits, temperature, training=False)
    jax.block_until_ready(scaled_eval)

    # sanity checks against a pure-JAX reference
    ref_scaled = logits / temperature[None, :]
    assert np.allclose(np.asarray(scaled), np.asarray(ref_scaled), rtol=1e-5, atol=1e-5)
    assert np.allclose(np.asarray(scaled_eval), np.asarray(ref_scaled), rtol=1e-5, atol=1e-5)
    ref_loss = float(_reference_ece(ref_scaled, labels))
    assert abs(float(loss) - ref_loss) < 5e-2, (float(loss), ref_loss)
    assert softmaxed is None

    print("KERNEL_OK")
</pallas_src>

<mosaic_0001>
module attributes {stable_mosaic.version = 11 : i64} {
  func.func @kernel(%arg0: i32, %arg1: memref<64x8xf32, #tpu.memory_space<vmem>>, %arg2: memref<1x8xf32, #tpu.memory_space<vmem>>, %arg3: memref<64x1xi32, #tpu.memory_space<vmem>>, %arg4: memref<64x8xf32, #tpu.memory_space<vmem>>, %arg5: memref<1x1xf32, #tpu.memory_space<vmem>>, %arg6: memref<1x15xf32, #tpu.memory_space<vmem>>) attributes {dimension_semantics = [#tpu.dimension_semantics<arbitrary>], iteration_bounds = array<i64: 1>, scalar_prefetch = 0 : i64, scratch_operands = 1 : i64, tpu.core_type = #tpu.core_type<tc>, window_params = [{transform_indices = @transform_0, window_bounds = array<i64: 64, 8>}, {pipeline_mode = #tpu.pipeline_mode<synchronous>, transform_indices = @transform_1, window_bounds = array<i64: 1, 8>}, {transform_indices = @transform_2, window_bounds = array<i64: 64, 1>}, {transform_indices = @transform_3, window_bounds = array<i64: 64, 8>}, {pipeline_mode = #tpu.pipeline_mode<synchronous>, transform_indices = @transform_4, window_bounds = array<i64: 1, 1>}]} {
    %c0_i32 = arith.constant 0 : i32
    %0 = arith.cmpi eq, %arg0, %c0_i32 : i32
    %1 = arith.extui %0 : i1 to i32
    %c0_i32_0 = arith.constant 0 : i32
    %2 = arith.cmpi ne, %1, %c0_i32_0 : i32
    scf.if %2 {
      %cst_24 = arith.constant 0.000000e+00 : f32
      %69 = vector.broadcast %cst_24 : f32 to vector<1x15xf32>
      %c0_25 = arith.constant 0 : index
      %c0_26 = arith.constant 0 : index
      %70 = vector.load %arg6[%c0_25, %c0_26] : memref<1x15xf32, #tpu.memory_space<vmem>>, vector<1x15xf32>
      tpu.vector_store %arg6[%c0_25, %c0_26], %69 {strides = array<i32>} : memref<1x15xf32, #tpu.memory_space<vmem>>, vector<1x15xf32>,
    } else {
    }
    %c0 = arith.constant 0 : index
    %c0_1 = arith.constant 0 : index
    %3 = vector.load %arg1[%c0, %c0_1] : memref<64x8xf32, #tpu.memory_space<vmem>>, vector<64x8xf32>
    %c0_2 = arith.constant 0 : index
    %c0_3 = arith.constant 0 : index
    %4 = vector.load %arg2[%c0_2, %c0_3] : memref<1x8xf32, #tpu.memory_space<vmem>>, vector<1x8xf32>
    %5 = vector.broadcast %4 : vector<1x8xf32> to vector<64x8xf32>
    %6 = arith.mulf %3, %5 : vector<64x8xf32>
    %c0_4 = arith.constant 0 : index
    %c0_5 = arith.constant 0 : index
    %7 = vector.load %arg4[%c0_4, %c0_5] : memref<64x8xf32, #tpu.memory_space<vmem>>, vector<64x8xf32>
    tpu.vector_store %arg4[%c0_4, %c0_5], %6 {strides = array<i32>} : memref<64x8xf32, #tpu.memory_space<vmem>>, vector<64x8xf32>,
    %cst = arith.constant dense<0xFF800000> : vector<64xf32>
    %8 = vector.multi_reduction <maximumf>, %6, %cst [1] : vector<64x8xf32> to vector<64xf32>
    %9 = vector.shape_cast %8 : vector<64xf32> to vector<64x1xf32>
    %10 = vector.broadcast %9 : vector<64x1xf32> to vector<64x8xf32>
    %11 = arith.subf %6, %10 : vector<64x8xf32>
    %12 = math.exp %11 : vector<64x8xf32>
    %cst_6 = arith.constant dense<0.000000e+00> : vector<64xf32>
    %13 = vector.multi_reduction <add>, %12, %cst_6 [1] : vector<64x8xf32> to vector<64xf32>
    %14 = vector.shape_cast %13 : vector<64xf32> to vector<64x1xf32>
    %15 = tpu.reciprocal %14 : vector<64x1xf32> -> vector<64x1xf32>
    %16 = tpu.iota {dimensions = array<i32: 1>} : vector<64x8xi32>
    %17 = vector.broadcast %9 : vector<64x1xf32> to vector<64x8xf32>
    %18 = arith.cmpf oeq, %6, %17 : vector<64x8xf32>
    %c8_i32 = arith.constant 8 : i32
    %19 = vector.broadcast %c8_i32 : i32 to vector<64x8xi32>
    %20 = arith.select %18, %16, %19 : vector<64x8xi1>, vector<64x8xi32>
    %cst_7 = arith.constant dense<2147483647> : vector<64xi32>
    %21 = vector.multi_reduction <minsi>, %20, %cst_7 [1] : vector<64x8xi32> to vector<64xi32>
    %22 = vector.shape_cast %21 : vector<64xi32> to vector<64x1xi32>
    %c0_8 = arith.constant 0 : index
    %c0_9 = arith.constant 0 : index
    %23 = vector.load %arg3[%c0_8, %c0_9] : memref<64x1xi32, #tpu.memory_space<vmem>>, vector<64x1xi32>
    %24 = arith.cmpi eq, %22, %23 : vector<64x1xi32>
    %25 = arith.extui %24 : vector<64x1xi1> to vector<64x1xi32>
    %26 = arith.sitofp %25 : vector<64x1xi32> to vector<64x1xf32>
    %c64_i32 = arith.constant 64 : i32
    %27 = arith.muli %arg0, %c64_i32 : i32
    %28 = tpu.iota {dimensions = array<i32: 0>} : vector<64x1xi32>
    %29 = vector.broadcast %27 : i32 to vector<64x1xi32>
    %30 = arith.addi %29, %28 : vector<64x1xi32>
    %c64_i32_10 = arith.constant 64 : i32
    %31 = vector.broadcast %c64_i32_10 : i32 to vector<64x1xi32>
    %32 = arith.cmpi slt, %30, %31 : vector<64x1xi32>
    %33 = arith.extui %32 : vector<64x1xi1> to vector<64x1xi32>
    %34 = arith.sitofp %33 : vector<64x1xi32> to vector<64x1xf32>
    %35 = arith.subf %15, %26 : vector<64x1xf32>
    %36 = arith.mulf %35, %34 : vector<64x1xf32>
    %cst_11 = arith.constant 1.500000e+01 : f32
    %37 = vector.broadcast %cst_11 : f32 to vector<64x1xf32>
    %38 = arith.mulf %15, %37 : vector<64x1xf32>
    %39 = math.ceil %38 : vector<64x1xf32>
    %40 = arith.fptosi %39 : vector<64x1xf32> to vector<64x1xi32>
    %c1_i32 = arith.constant 1 : i32
    %41 = vector.broadcast %c1_i32 : i32 to vector<64x1xi32>
    %42 = arith.subi %40, %41 : vector<64x1xi32>
    %c0_i32_12 = arith.constant 0 : i32
    %c14_i32 = arith.constant 14 : i32
    %43 = vector.broadcast %c0_i32_12 : i32 to vector<64x1xi32>
    %44 = arith.maxsi %43, %42 : vector<64x1xi32>
    %45 = vector.broadcast %c14_i32 : i32 to vector<64x1xi32>
    %46 = arith.minsi %45, %44 : vector<64x1xi32>
    %47 = tpu.iota {dimensions = array<i32: 1>} : vector<64x15xi32>
    %48 = vector.broadcast %46 : vector<64x1xi32> to vector<64x15xi32>
    %49 = arith.cmpi eq, %47, %48 : vector<64x15xi32>
    %50 = arith.extui %49 : vector<64x15xi1> to vector<64x15xi32>
    %51 = arith.sitofp %50 : vector<64x15xi32> to vector<64x15xf32>
    %c0_13 = arith.constant 0 : index
    %c0_14 = arith.constant 0 : index
    %52 = vector.load %arg6[%c0_13, %c0_14] : memref<1x15xf32, #tpu.memory_space<vmem>>, vector<1x15xf32>
    %53 = vector.broadcast %36 : vector<64x1xf32> to vector<64x15xf32>
    %54 = arith.mulf %51, %53 : vector<64x15xf32>
    %cst_15 = arith.constant dense<0.000000e+00> : vector<15xf32>
    %55 = vector.multi_reduction <add>, %54, %cst_15 [0] : vector<64x15xf32> to vector<15xf32>
    %56 = vector.shape_cast %55 : vector<15xf32> to vector<1x15xf32>
    %57 = arith.addf %52, %56 : vector<1x15xf32>
    %c0_16 = arith.constant 0 : index
    %c0_17 = arith.constant 0 : index
    %58 = vector.load %arg6[%c0_16, %c0_17] : memref<1x15xf32, #tpu.memory_space<vmem>>, vector<1x15xf32>
    tpu.vector_store %arg6[%c0_16, %c0_17], %57 {strides = array<i32>} : memref<1x15xf32, #tpu.memory_space<vmem>>, vector<1x15xf32>,
    %c0_18 = arith.constant 0 : index
    %c0_19 = arith.constant 0 : index
    %59 = vector.load %arg6[%c0_18, %c0_19] : memref<1x15xf32, #tpu.memory_space<vmem>>, vector<1x15xf32>
    %60 = math.absf %59 : vector<1x15xf32>
    %61 = vector.shape_cast %60 : vector<1x15xf32> to vector<1x1x15xf32>
    %cst_20 = arith.constant dense<0.000000e+00> : vector<1xf32>
    %62 = vector.multi_reduction <add>, %61, %cst_20 [1, 2] : vector<1x1x15xf32> to vector<1xf32>
    %63 = vector.shape_cast %62 : vector<1xf32> to vector<1x1x1xf32>
    %64 = vector.extract %63[0, 0, 0] : f32 from vector<1x1x1xf32>
    %65 = vector.broadcast %64 : f32 to vector<1x1xf32>
    %cst_21 = arith.constant 6.400000e+01 : f32
    %66 = vector.broadcast %cst_21 : f32 to vector<1x1xf32>
    %67 = arith.divf %65, %66 : vector<1x1xf32>
    %c0_22 = arith.constant 0 : index
    %c0_23 = arith.constant 0 : index
    %68 = vector.load %arg5[%c0_22, %c0_23] : memref<1x1xf32, #tpu.memory_space<vmem>>, vector<1x1xf32>
    tpu.vector_store %arg5[%c0_22, %c0_23], %67 {strides = array<i32>} : memref<1x1xf32, #tpu.memory_space<vmem>>, vector<1x1xf32>,
    return
  }
  func.func @transform_0(%arg0: i32) -> (i32, i32) {
    %c0_i32 = arith.constant 0 : i32
    %c0_i32_0 = arith.constant 0 : i32
    return %arg0, %c0_i32 : i32, i32
  }
  func.func @transform_1(%arg0: i32) -> (i32, i32) {
    %c0_i32 = arith.constant 0 : i32
    %c0_i32_0 = arith.constant 0 : i32
    %c0_i32_1 = arith.constant 0 : i32
    return %c0_i32, %c0_i32_0 : i32, i32
  }
  func.func @transform_2(%arg0: i32) -> (i32, i32) {
    %c0_i32 = arith.constant 0 : i32
    %c0_i32_0 = arith.constant 0 : i32
    return %arg0, %c0_i32 : i32, i32
  }
  func.func @transform_3(%arg0: i32) -> (i32, i32) {
    %c0_i32 = arith.constant 0 : i32
    %c0_i32_0 = arith.constant 0 : i32
    return %arg0, %c0_i32 : i32, i32
  }
  func.func @transform_4(%arg0: i32) -> (i32, i32) {
    %c0_i32 = arith.constant 0 : i32
    %c0_i32_0 = arith.constant 0 : i32
    %c0_i32_1 = arith.constant 0 : i32
    return %c0_i32, %c0_i32_0 : i32, i32
  }
}

</mosaic_0001>

<llo_original>
// kernel: tpu_custom_call.1
$region0: #{tpu_custom_call.1}
  #allocation0 [shape = 'u32[]', space=smem, size = 0x4, offset = 0x4, fixed_abs, tag = 'smem constant byte address 0x4 - core index']
  #allocation1 [shape = 'u32[144,128]{1,0:T(1,128)}', space=vmem, size = 0x12000, scoped, tag = 'internal scratch']
  #allocation2 [shape = 'f32[1,15]{1,0:T(1,128)}', space=vmem, size = 0x200, scoped, tag = 'scratch operand']
  %s0 = inlined_call_operand.vmem [shape: f32[64,8], index: 0, kind: input, shape index: {}]
  %s1 = inlined_call_operand.vmem [shape: f32[1,8], index: 1, kind: input, shape index: {}]
  %s2 = inlined_call_operand.vmem [shape: s32[64,1], index: 2, kind: input, shape index: {}]
  %s3 = inlined_call_operand.vmem [shape: f32[64,8], index: 3, kind: output, shape index: {0}]
  %s4 = inlined_call_operand.hbm [shape: f32[1,1], index: 4, kind: output, shape index: {1}]
  %5 = xla_tuple %s3, %s4
  %s6 = sld [smem:[#allocation0]]
  $region34: #{tpu_custom_call.1} parent=0
    _
  %s8 = ssub.s32 1, %s6
  %s9 = scalar_select 0, %s8, %s6
  $region1: #{tpu_custom_call.1} parent=0
    #allocation3 [shape = 'u8[512]{0}', space=vmem, size = 0x400, scoped, tag = 'output window, operand 1, single buffered']
    #allocation4 [shape = 's32[1]{0}', space=sflag, size = 0x4, scoped, tag = 'scoped memory for tpu_custom_call.1']
    %10 = vsyncpa [#allocation4], 0
    // Predicated region
    $region2: #{tpu_custom_call.1} parent=1 // pred_check
      _
    $region3: #{tpu_custom_call.1} parent=1 // pred_check_branch
      %12 = sbr.rel (0) target = $region5
    $region4: #{tpu_custom_call.1} parent=1 // pred_region
      _
    $region5: #{tpu_custom_call.1} parent=1 // pred_fallthru
      _
    // Predicated region
    $region6: #{tpu_custom_call.1} parent=1 // pred_check
      _
    $region7: #{tpu_custom_call.1} parent=1 // pred_check_branch
      %14 = sbr.rel (0) target = $region9
    $region8: #{tpu_custom_call.1} parent=1 // pred_region
      _
    $region9: #{tpu_custom_call.1} parent=1 // pred_fallthru
      _
    // Predicated region
    $region10: #{tpu_custom_call.1} parent=1 // pred_check
      _
    $region11: #{tpu_custom_call.1} parent=1 // pred_check_branch
      %16 = sbr.rel (0) target = $region13
    $region12: #{tpu_custom_call.1} parent=1 // pred_region
      _
    $region13: #{tpu_custom_call.1} parent=1 // pred_fallthru
      _
    %p17 = scmp.eq.s32.totalorder 0, 0
    // Predicated region
    $region14: #{tpu_custom_call.1} parent=1 // pred_check
      %p18 = pneg %p17
    $region15: #{tpu_custom_call.1} parent=1 // pred_check_branch
      %20 = sbr.rel (%p18) target = $region17
    $region16: #{tpu_custom_call.1} parent=1 // pred_region
      %vm21 = vcmask 114688
      %22 = vst.msk [vmem:[#allocation2] sm:$0x1] %vm21, 0.0
    $region17: #{tpu_custom_call.1} parent=1 // pred_fallthru
      _
    %v23 = vld [vmem:[%s0] sm:$0xff]
    %v24 = vld [vmem:[%s0 + $0x8] sm:$0xff]
    %v25 = vld [vmem:[%s0 + $0x10] sm:$0xff]
    %v26 = vld [vmem:[%s0 + $0x18] sm:$0xff]
    %v27 = vld [vmem:[%s0 + $0x20] sm:$0xff]
    %v28 = vld [vmem:[%s0 + $0x28] sm:$0xff]
    %v29 = vld [vmem:[%s0 + $0x30] sm:$0xff]
    %v30 = vld [vmem:[%s0 + $0x38] sm:$0xff]
    %v31 = vld [vmem:[%s1] sm:$0x1]
    %v33 = vlaneseq
    %v34 = vshrl.u32 %v33, 7
    %v35 = vsub.s32 0, %v34
    %v36 = vrot.slane %v31, %v35
    %v38 = vmul.f32 %v23, %v36
    %v39 = vmul.f32 %v24, %v36
    %v40 = vmul.f32 %v25, %v36
    %v41 = vmul.f32 %v26, %v36
    %v42 = vmul.f32 %v27, %v36
    %v43 = vmul.f32 %v28, %v36
    %v44 = vmul.f32 %v29, %v36
    %v45 = vmul.f32 %v30, %v36
    %vm46 = vcmask 64512
    %47 = vst.msk [vmem:[%s3] sm:$0xff] %vm46, %v38
    %48 = vst.msk [vmem:[%s3 + $0x8] sm:$0xff] %vm46, %v39
    %49 = vst.msk [vmem:[%s3 + $0x10] sm:$0xff] %vm46, %v40
    %50 = vst.msk [vmem:[%s3 + $0x18] sm:$0xff] %vm46, %v41
    %51 = vst.msk [vmem:[%s3 + $0x20] sm:$0xff] %vm46, %v42
    %52 = vst.msk [vmem:[%s3 + $0x28] sm:$0xff] %vm46, %v43
    %53 = vst.msk [vmem:[%s3 + $0x30] sm:$0xff] %vm46, %v44
    %54 = vst.msk [vmem:[%s3 + $0x38] sm:$0xff] %vm46, %v45
    %v55 = vsel %vm46, %v38, -inf
    %56 = vmax.xlane.f32.xlu0 %v55
    %v57 = vpop.xlane.xlu0 %56
    %v58 = vsel %vm46, %v39, -inf
    %59 = vmax.xlane.f32.xlu0 %v58
    %v60 = vpop.xlane.xlu0 %59
    %v61 = vsel %vm46, %v40, -inf
    %62 = vmax.xlane.f32.xlu0 %v61
    %v63 = vpop.xlane.xlu0 %62
    %v64 = vsel %vm46, %v41, -inf
    %65 = vmax.xlane.f32.xlu0 %v64
    %v66 = vpop.xlane.xlu0 %65
    %v67 = vsel %vm46, %v42, -inf
    %68 = vmax.xlane.f32.xlu0 %v67
    %v69 = vpop.xlane.xlu0 %68
    %v70 = vsel %vm46, %v43, -inf
    %71 = vmax.xlane.f32.xlu0 %v70
    %v72 = vpop.xlane.xlu0 %71
    %v73 = vsel %vm46, %v44, -inf
    %74 = vmax.xlane.f32.xlu0 %v73
    %v75 = vpop.xlane.xlu0 %74
    %v76 = vsel %vm46, %v45, -inf
    %77 = vmax.xlane.f32.xlu0 %v76
    %v78 = vpop.xlane.xlu0 %77
    %v79 = vsub.f32 %v38, %v57
    %v80 = vsub.f32 %v39, %v60
    %v81 = vsub.f32 %v40, %v63
    %v82 = vsub.f32 %v41, %v66
    %v83 = vsub.f32 %v42, %v69
    %v84 = vsub.f32 %v43, %v72
    %v85 = vsub.f32 %v44, %v75
    %v86 = vsub.f32 %v45, %v78
    %v87 = vmul.f32 %v79, 1.442695
    %v88 = vpow.pop %v87
    %v89 = vmul.f32 %v80, 1.442695
    %v90 = vpow.pop %v89
    %v91 = vmul.f32 %v81, 1.442695
    %v92 = vpow.pop %v91
    %v93 = vmul.f32 %v82, 1.442695
    %v94 = vpow.pop %v93
    %v95 = vmul.f32 %v83, 1.442695
    %v96 = vpow.pop %v95
    %v97 = vmul.f32 %v84, 1.442695
    %v98 = vpow.pop %v97
    %v99 = vmul.f32 %v85, 1.442695
    %v100 = vpow.pop %v99
    %v101 = vmul.f32 %v86, 1.442695
    %v102 = vpow.pop %v101
    %v103 = vsel %vm46, %v88, 0.0
    %104 = vadd.xlane.f32.xlu0 %v103
    %v105 = vpop.xlane.xlu0 %104
    %v106 = vsel %vm46, %v90, 0.0
    %107 = vadd.xlane.f32.xlu0 %v106
    %v108 = vpop.xlane.xlu0 %107
    %v109 = vsel %vm46, %v92, 0.0
    %110 = vadd.xlane.f32.xlu0 %v109
    %v111 = vpop.xlane.xlu0 %110
    %v112 = vsel %vm46, %v94, 0.0
    %113 = vadd.xlane.f32.xlu0 %v112
    %v114 = vpop.xlane.xlu0 %113
    %v115 = vsel %vm46, %v96, 0.0
    %116 = vadd.xlane.f32.xlu0 %v115
    %v117 = vpop.xlane.xlu0 %116
    %v118 = vsel %vm46, %v98, 0.0
    %119 = vadd.xlane.f32.xlu0 %v118
    %v120 = vpop.xlane.xlu0 %119
    %v121 = vsel %vm46, %v100, 0.0
    %122 = vadd.xlane.f32.xlu0 %v121
    %v123 = vpop.xlane.xlu0 %122
    %v124 = vsel %vm46, %v102, 0.0
    %125 = vadd.xlane.f32.xlu0 %v124
    %v126 = vpop.xlane.xlu0 %125
    %v127 = vrcp.pop %v105
    %v128 = vrcp.pop %v108
    %v129 = vrcp.pop %v111
    %v130 = vrcp.pop %v114
    %v131 = vrcp.pop %v117
    %v132 = vrcp.pop %v120
    %v133 = vrcp.pop %v123
    %v134 = vrcp.pop %v126
    %v135 = vlaneseq
    %v136 = vand.u32 %v135, 127
    %vm137 = vcmp.eq.f32.partialorder %v38, %v57
    %vm138 = vcmp.eq.f32.partialorder %v39, %v60
    %vm139 = vcmp.eq.f32.partialorder %v40, %v63
    %vm140 = vcmp.eq.f32.partialorder %v41, %v66
    %vm141 = vcmp.eq.f32.partialorder %v42, %v69
    %vm142 = vcmp.eq.f32.partialorder %v43, %v72
    %vm143 = vcmp.eq.f32.partialorder %v44, %v75
    %vm144 = vcmp.eq.f32.partialorder %v45, %v78
    %v145 = vsel %vm137, %v136, 8
    %v146 = vsel %vm138, %v136, 8
    %v147 = vsel %vm139, %v136, 8
    %v148 = vsel %vm140, %v136, 8
    %v149 = vsel %vm141, %v136, 8
    %v150 = vsel %vm142, %v136, 8
    %v151 = vsel %vm143, %v136, 8
    %v152 = vsel %vm144, %v136, 8
    %v153 = vsel %vm46, %v145, 2147483647
    %v154 = vand.u32 %v153, 65535
    %v155 = vshra.s32 %v153, 16
    %v156 = vcvt.s32.f32 %v154
    %v157 = vcvt.s32.f32 %v155
    %158 = vmin.xlane.f32.xlu0 %v157
    %v159 = vpop.xlane.xlu0 %158
    %vm160 = vcmp.eq.f32.partialorder %v157, %v159
    %v161 = vsel %vm160, %v156, inf
    %162 = vmin.xlane.f32.xlu0 %v161
    %v163 = vpop.xlane.xlu0 %162
    %v164 = vcvt.f32.s32 %v163
    %v165 = vcvt.f32.s32 %v159
    %v166 = vshll.u32 %v165, 16
    %v167 = vadd.s32 %v166, %v164
    %v168 = vsel %vm46, %v146, 2147483647
    %v169 = vand.u32 %v168, 65535
    %v170 = vshra.s32 %v168, 16
    %v171 = vcvt.s32.f32 %v169
    %v172 = vcvt.s32.f32 %v170
    %173 = vmin.xlane.f32.xlu0 %v172
    %v174 = vpop.xlane.xlu0 %173
    %vm175 = vcmp.eq.f32.partialorder %v172, %v174
    %v176 = vsel %vm175, %v171, inf
    %177 = vmin.xlane.f32.xlu0 %v176
    %v178 = vpop.xlane.xlu0 %177
    %v179 = vcvt.f32.s32 %v178
    %v180 = vcvt.f32.s32 %v174
    %v181 = vshll.u32 %v180, 16
    %v182 = vadd.s32 %v181, %v179
    %v183 = vsel %vm46, %v147, 2147483647
    %v184 = vand.u32 %v183, 65535
    %v185 = vshra.s32 %v183, 16
    %v186 = vcvt.s32.f32 %v184
    %v187 = vcvt.s32.f32 %v185
    %188 = vmin.xlane.f32.xlu0 %v187
    %v189 = vpop.xlane.xlu0 %188
    %vm190 = vcmp.eq.f32.partialorder %v187, %v189
    %v191 = vsel %vm190, %v186, inf
    %192 = vmin.xlane.f32.xlu0 %v191
    %v193 = vpop.xlane.xlu0 %192
    %v194 = vcvt.f32.s32 %v193
    %v195 = vcvt.f32.s32 %v189
    %v196 = vshll.u32 %v195, 16
    %v197 = vadd.s32 %v196, %v194
    %v198 = vsel %vm46, %v148, 2147483647
    %v199 = vand.u32 %v198, 65535
    %v200 = vshra.s32 %v198, 16
    %v201 = vcvt.s32.f32 %v199
    %v202 = vcvt.s32.f32 %v200
    %203 = vmin.xlane.f32.xlu0 %v202
    %v204 = vpop.xlane.xlu0 %203
    %vm205 = vcmp.eq.f32.partialorder %v202, %v204
    %v206 = vsel %vm205, %v201, inf
    %207 = vmin.xlane.f32.xlu0 %v206
    %v208 = vpop.xlane.xlu0 %207
    %v209 = vcvt.f32.s32 %v208
    %v210 = vcvt.f32.s32 %v204
    %v211 = vshll.u32 %v210, 16
    %v212 = vadd.s32 %v211, %v209
    %v213 = vsel %vm46, %v149, 2147483647
    %v214 = vand.u32 %v213, 65535
    %v215 = vshra.s32 %v213, 16
    %v216 = vcvt.s32.f32 %v214
    %v217 = vcvt.s32.f32 %v215
    %218 = vmin.xlane.f32.xlu0 %v217
    %v219 = vpop.xlane.xlu0 %218
    %vm220 = vcmp.eq.f32.partialorder %v217, %v219
    %v221 = vsel %vm220, %v216, inf
    %222 = vmin.xlane.f32.xlu0 %v221
    %v223 = vpop.xlane.xlu0 %222
    %v224 = vcvt.f32.s32 %v223
    %v225 = vcvt.f32.s32 %v219
    %v226 = vshll.u32 %v225, 16
    %v227 = vadd.s32 %v226, %v224
    %v228 = vsel %vm46, %v150, 2147483647
    %v229 = vand.u32 %v228, 65535
    %v230 = vshra.s32 %v228, 16
    %v231 = vcvt.s32.f32 %v229
    %v232 = vcvt.s32.f32 %v230
    %233 = vmin.xlane.f32.xlu0 %v232
    %v234 = vpop.xlane.xlu0 %233
    %vm235 = vcmp.eq.f32.partialorder %v232, %v234
    %v236 = vsel %vm235, %v231, inf
    %237 = vmin.xlane.f32.xlu0 %v236
    %v238 = vpop.xlane.xlu0 %237
    %v239 = vcvt.f32.s32 %v238
    %v240 = vcvt.f32.s32 %v234
    %v241 = vshll.u32 %v240, 16
    %v242 = vadd.s32 %v241, %v239
    %v243 = vsel %vm46, %v151, 2147483647
    %v244 = vand.u32 %v243, 65535
    %v245 = vshra.s32 %v243, 16
    %v246 = vcvt.s32.f32 %v244
    %v247 = vcvt.s32.f32 %v245
    %248 = vmin.xlane.f32.xlu0 %v247
    %v249 = vpop.xlane.xlu0 %248
    %vm250 = vcmp.eq.f32.partialorder %v247, %v249
    %v251 = vsel %vm250, %v246, inf
    %252 = vmin.xlane.f32.xlu0 %v251
    %v253 = vpop.xlane.xlu0 %252
    %v254 = vcvt.f32.s32 %v253
    %v255 = vcvt.f32.s32 %v249
    %v256 = vshll.u32 %v255, 16
    %v257 = vadd.s32 %v256, %v254
    %v258 = vsel %vm46, %v152, 2147483647
    %v259 = vand.u32 %v258, 65535
    %v260 = vshra.s32 %v258, 16
    %v261 = vcvt.s32.f32 %v259
    %v262 = vcvt.s32.f32 %v260
    %263 = vmin.xlane.f32.xlu0 %v262
    %v264 = vpop.xlane.xlu0 %263
    %vm265 = vcmp.eq.f32.partialorder %v262, %v264
    %v266 = vsel %vm265, %v261, inf
    %267 = vmin.xlane.f32.xlu0 %v266
    %v268 = vpop.xlane.xlu0 %267
    %v269 = vcvt.f32.s32 %v268
    %v270 = vcvt.f32.s32 %v264
    %v271 = vshll.u32 %v270, 16
    %v272 = vadd.s32 %v271, %v269
    %v273 = vld [vmem:[%s2] sm:$0xff]
    %v274 = vld [vmem:[%s2 + $0x8] sm:$0xff]
    %v275 = vld [vmem:[%s2 + $0x10] sm:$0xff]
    %v276 = vld [vmem:[%s2 + $0x18] sm:$0xff]
    %v277 = vld [vmem:[%s2 + $0x20] sm:$0xff]
    %v278 = vld [vmem:[%s2 + $0x28] sm:$0xff]
    %v279 = vld [vmem:[%s2 + $0x30] sm:$0xff]
    %v280 = vld [vmem:[%s2 + $0x38] sm:$0xff]
    %vm281 = vcmp.eq.s32.totalorder %v167, %v273
    %vm282 = vcmp.eq.s32.totalorder %v182, %v274
    %vm283 = vcmp.eq.s32.totalorder %v197, %v275
    %vm284 = vcmp.eq.s32.totalorder %v212, %v276
    %vm285 = vcmp.eq.s32.totalorder %v227, %v277
    %vm286 = vcmp.eq.s32.totalorder %v242, %v278
    %vm287 = vcmp.eq.s32.totalorder %v257, %v279
    %vm288 = vcmp.eq.s32.totalorder %v272, %v280
    %v289 = vsel %vm281, 1, 0
    %v290 = vsel %vm282, 1, 0
    %v291 = vsel %vm283, 1, 0
    %v292 = vsel %vm284, 1, 0
    %v293 = vsel %vm285, 1, 0
    %v294 = vsel %vm286, 1, 0
    %v295 = vsel %vm287, 1, 0
    %v296 = vsel %vm288, 1, 0
    %v297 = vcvt.s32.f32 %v289
    %v298 = vcvt.s32.f32 %v290
    %v299 = vcvt.s32.f32 %v291
    %v300 = vcvt.s32.f32 %v292
    %v301 = vcvt.s32.f32 %v293
    %v302 = vcvt.s32.f32 %v294
    %v303 = vcvt.s32.f32 %v295
    %v304 = vcvt.s32.f32 %v296
    %s305 = smul.u32 0, 64
    %v306 = vlaneseq
    %v307 = vshrl.u32 %v306, 7
    %v308 = vadd.s32 %v307, 8
    %v309 = vadd.s32 %v307, 16
    %v310 = vadd.s32 %v307, 24
    %v311 = vadd.s32 %v307, 32
    %v312 = vadd.s32 %v307, 40
    %v313 = vadd.s32 %v307, 48
    %v314 = vadd.s32 %v307, 56
    %v315 = vstv %s305
    %v316 = vadd.s32 %v315, %v307
    %v317 = vadd.s32 %v315, %v308
    %v318 = vadd.s32 %v315, %v309
    %v319 = vadd.s32 %v315, %v310
    %v320 = vadd.s32 %v315, %v311
    %v321 = vadd.s32 %v315, %v312
    %v322 = vadd.s32 %v315, %v313
    %v323 = vadd.s32 %v315, %v314
    %vm324 = vcmp.lt.s32.totalorder %v316, 64
    %vm325 = vcmp.lt.s32.totalorder %v317, 64
    %vm326 = vcmp.lt.s32.totalorder %v318, 64
    %vm327 = vcmp.lt.s32.totalorder %v319, 64
    %vm328 = vcmp.lt.s32.totalorder %v320, 64
    %vm329 = vcmp.lt.s32.totalorder %v321, 64
    %vm330 = vcmp.lt.s32.totalorder %v322, 64
    %vm331 = vcmp.lt.s32.totalorder %v323, 64
    %v332 = vsel %vm324, 1, 0
    %v333 = vsel %vm325, 1, 0
    %v334 = vsel %vm326, 1, 0
    %v335 = vsel %vm327, 1, 0
    %v336 = vsel %vm328, 1, 0
    %v337 = vsel %vm329, 1, 0
    %v338 = vsel %vm330, 1, 0
    %v339 = vsel %vm331, 1, 0
    %v340 = vcvt.s32.f32 %v332
    %v341 = vcvt.s32.f32 %v333
    %v342 = vcvt.s32.f32 %v334
    %v343 = vcvt.s32.f32 %v335
    %v344 = vcvt.s32.f32 %v336
    %v345 = vcvt.s32.f32 %v337
    %v346 = vcvt.s32.f32 %v338
    %v347 = vcvt.s32.f32 %v339
    %v348 = vsub.f32 %v127, %v297
    %v349 = vsub.f32 %v128, %v298
    %v350 = vsub.f32 %v129, %v299
    %v351 = vsub.f32 %v130, %v300
    %v352 = vsub.f32 %v131, %v301
    %v353 = vsub.f32 %v132, %v302
    %v354 = vsub.f32 %v133, %v303
    %v355 = vsub.f32 %v134, %v304
    %v356 = vmul.f32 %v348, %v340
    %v357 = vmul.f32 %v349, %v341
    %v358 = vmul.f32 %v350, %v342
    %v359 = vmul.f32 %v351, %v343
    %v360 = vmul.f32 %v352, %v344
    %v361 = vmul.f32 %v353, %v345
    %v362 = vmul.f32 %v354, %v346
    %v363 = vmul.f32 %v355, %v347
    %v364 = vmul.f32 %v127, 15.0
    %v365 = vmul.f32 %v128, 15.0
    %v366 = vmul.f32 %v129, 15.0
    %v367 = vmul.f32 %v130, 15.0
    %v368 = vmul.f32 %v131, 15.0
    %v369 = vmul.f32 %v132, 15.0
    %v370 = vmul.f32 %v133, 15.0
    %v371 = vmul.f32 %v134, 15.0
    %v372 = vceil.f32 %v364
    %v373 = vceil.f32 %v365
    %v374 = vceil.f32 %v366
    %v375 = vceil.f32 %v367
    %v376 = vceil.f32 %v368
    %v377 = vceil.f32 %v369
    %v378 = vceil.f32 %v370
    %v379 = vceil.f32 %v371
    %v380 = vcvt.f32.s32.to.zero.pseudo %v372
    %v381 = vcvt.f32.s32.to.zero.pseudo %v373
    %v382 = vcvt.f32.s32.to.zero.pseudo %v374
    %v383 = vcvt.f32.s32.to.zero.pseudo %v375
    %v384 = vcvt.f32.s32.to.zero.pseudo %v376
    %v385 = vcvt.f32.s32.to.zero.pseudo %v377
    %v386 = vcvt.f32.s32.to.zero.pseudo %v378
    %v387 = vcvt.f32.s32.to.zero.pseudo %v379
    %v388 = vsub.s32 %v380, 1
    %v389 = vsub.s32 %v381, 1
    %v390 = vsub.s32 %v382, 1
    %v391 = vsub.s32 %v383, 1
    %v392 = vsub.s32 %v384, 1
    %v393 = vsub.s32 %v385, 1
    %v394 = vsub.s32 %v386, 1
    %v395 = vsub.s32 %v387, 1
    %vm396 = vcmp.gt.s32.totalorder %v388, 0
    %v397 = vsel %vm396, %v388, 0
    %vm398 = vcmp.gt.s32.totalorder %v389, 0
    %v399 = vsel %vm398, %v389, 0
    %vm400 = vcmp.gt.s32.totalorder %v390, 0
    %v401 = vsel %vm400, %v390, 0
    %vm402 = vcmp.gt.s32.totalorder %v391, 0
    %v403 = vsel %vm402, %v391, 0
    %vm404 = vcmp.gt.s32.totalorder %v392, 0
    %v405 = vsel %vm404, %v392, 0
    %vm406 = vcmp.gt.s32.totalorder %v393, 0
    %v407 = vsel %vm406, %v393, 0
    %vm408 = vcmp.gt.s32.totalorder %v394, 0
    %v409 = vsel %vm408, %v394, 0
    %vm410 = vcmp.gt.s32.totalorder %v395, 0
    %v411 = vsel %vm410, %v395, 0
    %vm412 = vcmp.lt.s32.totalorder %v397, 14
    %v413 = vsel %vm412, %v397, 14
    %vm414 = vcmp.lt.s32.totalorder %v399, 14
    %v415 = vsel %vm414, %v399, 14
    %vm416 = vcmp.lt.s32.totalorder %v401, 14
    %v417 = vsel %vm416, %v401, 14
    %vm418 = vcmp.lt.s32.totalorder %v403, 14
    %v419 = vsel %vm418, %v403, 14
    %vm420 = vcmp.lt.s32.totalorder %v405, 14
    %v421 = vsel %vm420, %v405, 14
    %vm422 = vcmp.lt.s32.totalorder %v407, 14
    %v423 = vsel %vm422, %v407, 14
    %vm424 = vcmp.lt.s32.totalorder %v409, 14
    %v425 = vsel %vm424, %v409, 14
    %vm426 = vcmp.lt.s32.totalorder %v411, 14
    %v427 = vsel %vm426, %v411, 14
    %vm428 = vcmp.eq.s32.totalorder %v136, %v413
    %vm429 = vcmp.eq.s32.totalorder %v136, %v415
    %vm430 = vcmp.eq.s32.totalorder %v136, %v417
    %vm431 = vcmp.eq.s32.totalorder %v136, %v419
    %vm432 = vcmp.eq.s32.totalorder %v136, %v421
    %vm433 = vcmp.eq.s32.totalorder %v136, %v423
    %vm434 = vcmp.eq.s32.totalorder %v136, %v425
    %vm435 = vcmp.eq.s32.totalorder %v136, %v427
    %v436 = vsel %vm428, 1, 0
    %v437 = vsel %vm429, 1, 0
    %v438 = vsel %vm430, 1, 0
    %v439 = vsel %vm431, 1, 0
    %v440 = vsel %vm432, 1, 0
    %v441 = vsel %vm433, 1, 0
    %v442 = vsel %vm434, 1, 0
    %v443 = vsel %vm435, 1, 0
    %v444 = vcvt.s32.f32 %v436
    %v445 = vcvt.s32.f32 %v437
    %v446 = vcvt.s32.f32 %v438
    %v447 = vcvt.s32.f32 %v439
    %v448 = vcvt.s32.f32 %v440
    %v449 = vcvt.s32.f32 %v441
    %v450 = vcvt.s32.f32 %v442
    %v451 = vcvt.s32.f32 %v443
    %v452 = vld [vmem:[#allocation2] sm:$0x1]
    %454 = vset.pattern.permute.xlu0 0
    %455 = vperm.xlu0 %454, %v356
    %v456 = vpop.permute.xlu0 %455
    %459 = vset.pattern.permute.xlu0 0
    %460 = vperm.xlu0 %459, %v357
    %v461 = vpop.permute.xlu0 %460
    %464 = vset.pattern.permute.xlu0 0
    %465 = vperm.xlu0 %464, %v358
    %v466 = vpop.permute.xlu0 %465
    %469 = vset.pattern.permute.xlu0 0
    %470 = vperm.xlu0 %469, %v359
    %v471 = vpop.permute.xlu0 %470
    %474 = vset.pattern.permute.xlu0 0
    %475 = vperm.xlu0 %474, %v360
    %v476 = vpop.permute.xlu0 %475
    %479 = vset.pattern.permute.xlu0 0
    %480 = vperm.xlu0 %479, %v361
    %v481 = vpop.permute.xlu0 %480
    %484 = vset.pattern.permute.xlu0 0
    %485 = vperm.xlu0 %484, %v362
    %v486 = vpop.permute.xlu0 %485
    %489 = vset.pattern.permute.xlu0 0
    %490 = vperm.xlu0 %489, %v363
    %v491 = vpop.permute.xlu0 %490
    %v493 = vmul.f32 %v444, %v456
    %v494 = vmul.f32 %v445, %v461
    %v495 = vmul.f32 %v446, %v466
    %v496 = vmul.f32 %v447, %v471
    %v497 = vmul.f32 %v448, %v476
    %v498 = vmul.f32 %v449, %v481
    %v499 = vmul.f32 %v450, %v486
    %v500 = vmul.f32 %v451, %v491
    %vm501 = vcmask 121856
    %v502 = vsel %vm501, %v493, 0.0
    %v503 = vsel %vm501, %v494, 0.0
    %v504 = vadd.f32 %v502, %v503
    %v505 = vsel %vm501, %v495, 0.0
    %v506 = vadd.f32 %v504, %v505
    %v507 = vsel %vm501, %v496, 0.0
    %v508 = vadd.f32 %v506, %v507
    %v509 = vsel %vm501, %v497, 0.0
    %v510 = vadd.f32 %v508, %v509
    %v511 = vsel %vm501, %v498, 0.0
    %v512 = vadd.f32 %v510, %v511
    %v513 = vsel %vm501, %v499, 0.0
    %v514 = vadd.f32 %v512, %v513
    %v515 = vsel %vm501, %v500, 0.0
    %v516 = vadd.f32 %v514, %v515
    %v517 = vrot.slane %v516, 4
    %v518 = vadd.f32 %v516, %v517
    %v519 = vrot.slane %v518, 2
    %v520 = vadd.f32 %v518, %v519
    %v521 = vrot.slane %v520, 1
    %v522 = vadd.f32 %v520, %v521
    %v523 = vadd.f32 %v452, %v522
    %vm524 = vcmask 114688
    %525 = vst.msk [vmem:[#allocation2] sm:$0x1] %vm524, %v523
    %v526 = vld [vmem:[#allocation2] sm:$0x1]
    %v527 = vand.u32 2147483647, %v526
    %v528 = vsel %vm524, %v527, 0.0
    %529 = vadd.xlane.f32.xlu0 %v528
    %v530 = vpop.xlane.xlu0 %529
    %v531 = vrot.slane %v530, 4
    %v532 = vadd.f32 %v530, %v531
    %v533 = vrot.slane %v532, 2
    %v534 = vadd.f32 %v532, %v533
    %v535 = vrot.slane %v534, 1
    %v536 = vadd.f32 %v534, %v535
    %s537 = vtos %v536
    %v538 = vstv %s537
    %v539 = vrcp.pop 64.0
    %v540 = vmul.f32 %v538, %v539
    %vm541 = vcmask 0
    %542 = vst.msk [vmem:[#allocation3] sm:$0x1] %vm541, %v540
    // Predicated region
    $region18: #{tpu_custom_call.1} parent=1 // pred_check
      _
    $region19: #{tpu_custom_call.1} parent=1 // pred_check_branch
      %544 = sbr.rel (0) target = $region21
    $region20: #{tpu_custom_call.1} parent=1 // pred_region
      _
    $region21: #{tpu_custom_call.1} parent=1 // pred_fallthru
      _
    // Predicated region
    $region22: #{tpu_custom_call.1} parent=1 // pred_check
      _
    $region23: #{tpu_custom_call.1} parent=1 // pred_check_branch
      %546 = sbr.rel (0) target = $region25
    $region24: #{tpu_custom_call.1} parent=1 // pred_region
      %s548 = ssub.s32 16, 16
      %549 = vsyncadd [#allocation4], %s548
      %s551 = sshll.u32 [#allocation3], 4
      %s552 = int_to_ptr.vmem [resolvable:$true] %s551
      %554 = dma.vmem_to_hbm [thread:$0]  %s552, 16, %s4, [#allocation4]
    $region25: #{tpu_custom_call.1} parent=1 // pred_fallthru
      _
    // Predicated region
    $region26: #{tpu_custom_call.1} parent=1 // pred_check
      _
    $region27: #{tpu_custom_call.1} parent=1 // pred_check_branch
      %556 = sbr.rel (0) target = $region29
    $region28: #{tpu_custom_call.1} parent=1 // pred_region
      _
    $region29: #{tpu_custom_call.1} parent=1 // pred_fallthru
      _
    // Predicated region
    $region30: #{tpu_custom_call.1} parent=1 // pred_check
      _
    $region31: #{tpu_custom_call.1} parent=1 // pred_check_branch
      %558 = sbr.rel (0) target = $region33
    $region32: #{tpu_custom_call.1} parent=1 // pred_region
      %559 = dma.done [#allocation4], 16
    $region33: #{tpu_custom_call.1} parent=1 // pred_fallthru
      _
    %560 = vsyncpa [#allocation4], 1

</llo_original>
